<compile_context>
chip_gen: v7x
topology: tpu7x:2x2x1
jax: 0.10.0
libtpu: 0.0.40
codegen_flags: <defaults>
</compile_context>

<pallas_src>
import functools
import numpy as np
import jax
import jax.numpy as jnp
from jax.experimental import pallas as pl
from jax.experimental.pallas import tpu as pltpu


def _round_up(x, m):
    return ((x + m - 1) // m) * m


def _pad2(x, rows, cols, value=0):
    """Pad trailing rows/cols, skipping the copy when no padding is needed."""
    if rows == 0 and cols == 0:
        return x
    return jnp.pad(x, ((0, rows), (0, cols)), constant_values=value)


# ---------------------------------------------------------------------------
# Kernel 1: tiled linear projection   node_embedding = node_features @ W^T + b
# ---------------------------------------------------------------------------
def _proj_kernel(x_ref, w_ref, b_ref, o_ref, acc_ref):
    k = pl.program_id(2)

    @pl.when(k == 0)
    def _():
        acc_ref[...] = jnp.zeros_like(acc_ref)

    acc_ref[...] += jnp.dot(x_ref[...], w_ref[...],
                            preferred_element_type=jnp.float32)

    @pl.when(k == pl.num_programs(2) - 1)
    def _():
        o_ref[...] = (acc_ref[...] + b_ref[...].astype(jnp.float32)).astype(o_ref.dtype)


def graph_projector(node_features, w_t, bias, *, out_dtype=None,
                    compute_dtype=None, tm=256, tn=256, tk=512):
    """node_features: (N, G); w_t: (G, H) = nn.Linear weight transposed; bias: (H,) or (1, H)."""
    N, G = node_features.shape
    H = w_t.shape[1]
    out_dtype = out_dtype if out_dtype is not None else node_features.dtype
    if compute_dtype is not None:          # e.g. jnp.bfloat16 for v6e/v7x MXU
        node_features = node_features.astype(compute_dtype)
        w_t = w_t.astype(compute_dtype)
    bias = bias.reshape(1, H)

    # Clamp tiles to the hardware-aligned problem size, then pad to tile multiples
    # (zero padding along K keeps the accumulation exact).
    tm = min(tm, _round_up(N, 8))
    tn = min(tn, _round_up(H, 128))
    tk = min(tk, _round_up(G, 128))
    Np, Hp, Gp = _round_up(N, tm), _round_up(H, tn), _round_up(G, tk)

    x = _pad2(node_features, Np - N, Gp - G)
    w = _pad2(w_t, Gp - G, Hp - H)
    b = _pad2(bias, 0, Hp - H)

    out = pl.pallas_call(
        _proj_kernel,
        out_shape=jax.ShapeDtypeStruct((Np, Hp), out_dtype),
        grid=(Np // tm, Hp // tn, Gp // tk),
        in_specs=[
            pl.BlockSpec((tm, tk), lambda i, j, k: (i, k)),
            pl.BlockSpec((tk, tn), lambda i, j, k: (k, j)),
            pl.BlockSpec((1, tn), lambda i, j, k: (0, j)),
        ],
        out_specs=pl.BlockSpec((tm, tn), lambda i, j, k: (i, j)),
        scratch_shapes=[pltpu.VMEM((tm, tn), jnp.float32)],
        compiler_params=pltpu.CompilerParams(
            dimension_semantics=("parallel", "parallel", "arbitrary")),
    )(x, w, b)
    return out[:N, :H]


# ---------------------------------------------------------------------------
# Kernel 2: fused node-row gather + masked merge (in-place on the token rows)
#   out[t] = node_embedding[src_idx[t]]  if src_idx[t] < n_nodes  else tok[t]
# The gather is done in-kernel via a one-hot MXU matmul against the VMEM-resident
# node_embedding tile, so no (T, H) node_rows array ever touches HBM, and the
# output is aliased onto the token-row buffer (no extra (T, H) allocation).
# ---------------------------------------------------------------------------
def _merge_kernel(idx_ref, tok_ref, nemb_ref, o_ref, *, n_nodes):
    idx = idx_ref[...]                                          # (tile_t, 1) int32
    nemb = nemb_ref[...]                                        # (N, tile_h)
    iota = jax.lax.broadcasted_iota(jnp.int32, (idx.shape[0], nemb.shape[0]), 1)
    onehot = (iota == idx).astype(nemb.dtype)                   # (tile_t, N); 0 rows for sentinel
    sel = jnp.dot(onehot, nemb, preferred_element_type=jnp.float32)   # gathered node rows
    is_node_row = idx < n_nodes                                 # (tile_t, 1) bool
    o_ref[...] = jnp.where(is_node_row, sel.astype(o_ref.dtype), tok_ref[...])


def merge_node_rows(src_idx, tok_rows, node_embedding, *, tile_t=512, tile_h=512):
    """src_idx: (T,) int32 in [0, N] (N == sentinel 'keep token row');
    tok_rows: (T, H); node_embedding: (N, H). Returns (T, H) in tok_rows.dtype."""
    T, H = tok_rows.shape
    N = node_embedding.shape[0]
    node_embedding = node_embedding.astype(tok_rows.dtype)

    # Large lane-dense tiles; pad T and H to tile multiples (padded rows use the
    # sentinel index, padded lanes are sliced off).
    tile_t = min(tile_t, _round_up(T, 8))
    tile_h = min(tile_h, _round_up(H, 128))
    Tp, Hp = _round_up(T, tile_t), _round_up(H, tile_h)

    idx = _pad2(src_idx.reshape(T, 1).astype(jnp.int32), Tp - T, 0, value=N)
    tok = _pad2(tok_rows, Tp - T, Hp - H)
    nemb = _pad2(node_embedding, 0, Hp - H)

    # Grid: H-tiles OUTER, T-tiles INNER -> the node_embedding block index is
    # constant across the inner loop and Pallas keeps it resident in VMEM
    # (fetched once per H-tile instead of once per (T-tile, H-tile)).
    # Output is aliased onto `tok` (input index 1): in-place update, each output
    # block is fully written exactly once.
    # TODO(synk): if N * tile_h * itemsize gets large (many graph nodes), tile N as
    # well or fall back to a scalar-prefetched per-row DMA gather.
    out = pl.pallas_call(
        functools.partial(_merge_kernel, n_nodes=N),
        out_shape=jax.ShapeDtypeStruct((Tp, Hp), tok_rows.dtype),
        grid=(Hp // tile_h, Tp // tile_t),
        in_specs=[
            pl.BlockSpec((tile_t, 1), lambda j, i: (i, 0)),
            pl.BlockSpec((tile_t, tile_h), lambda j, i: (i, j)),
            pl.BlockSpec((N, tile_h), lambda j, i: (0, j)),
        ],
        out_specs=pl.BlockSpec((tile_t, tile_h), lambda j, i: (i, j)),
        input_output_aliases={1: 0},
        compiler_params=pltpu.CompilerParams(
            dimension_semantics=("parallel", "parallel")),
    )(idx, tok, nemb)
    return out[:T, :H]


# ---------------------------------------------------------------------------
# Projector forward (glue around the two Pallas kernels)
# ---------------------------------------------------------------------------
@functools.partial(jax.jit, static_argnames=("num_edges", "compute_dtype"))
def _projector_forward_impl(embed_tokens, w_t, bias, input_ids, is_node,
                            node_features, mapping, *, num_edges, compute_dtype):
    n_nodes = node_features.shape[0]
    # Static length check (mirrors the PyTorch assert; shapes are trace-static).
    assert int(mapping.shape[0]) == n_nodes + num_edges
    # NOTE: the value check `mapping[-2] == n_nodes - 1` needs concrete data and
    # would force a host sync under jit; it is performed host-side by the caller.

    B, S = input_ids.shape
    H = embed_tokens.shape[1]

    # --- hot path 1: node projection on the MXU (tiled Pallas matmul) ---
    node_embedding = graph_projector(node_features, w_t, bias,
                                     out_dtype=embed_tokens.dtype,
                                     compute_dtype=compute_dtype)        # (N, H)

    # --- token embedding lookup (glue gather) ---
    # TODO(synk): fuse this gather into the merge kernel (scalar-prefetched
    # input_ids + per-row HBM DMA) so tok_rows never round-trips HBM as (T, H).
    tok_rows = jnp.take(embed_tokens, input_ids.reshape(-1), axis=0)     # (T, H)

    # --- per-token source node index reproducing boolean-mask assignment order ---
    # k-th True position (row-major) receives node_embedding[mapping[k]];
    # non-node positions get the sentinel n_nodes ("keep token row").
    flat_mask = is_node.reshape(-1)
    rank = jnp.clip(jnp.cumsum(flat_mask.astype(jnp.int32)) - 1,
                    0, mapping.shape[0] - 1)
    src_idx = jnp.where(flat_mask, mapping[rank].astype(jnp.int32), n_nodes)

    # --- hot path 2: fused gather + masked merge, in place on tok_rows ---
    out_flat = merge_node_rows(src_idx, tok_rows, node_embedding)        # (T, H)
    return out_flat.reshape(B, S, H)


def projector_forward(embed_tokens, w_t, bias, input_ids, is_node,
                      node_features_list, edge_index, mapping,
                      *, compute_dtype=None):
    assert isinstance(node_features_list, list)
    node_features = jnp.concatenate(node_features_list, axis=0)          # (N, G)
    return _projector_forward_impl(embed_tokens, w_t, bias, input_ids, is_node,
                                   node_features, mapping,
                                   num_edges=len(edge_index),
                                   compute_dtype=compute_dtype)


# ---------------------------------------------------------------------------
# Demo / self-test
# ---------------------------------------------------------------------------
if __name__ == "__main__":
    key = jax.random.PRNGKey(0)
    k_embed, k_w, k_b, k_nf1, k_nf2, k_ids = jax.random.split(key, 6)

    # Small, tile-friendly shapes.
    B, S = 2, 8            # tokens: T = 16
    V, H = 64, 128         # vocab, hidden
    G = 128                # args.gnn_input

    # Deterministic "parameters" (module __init__ shapes / init).
    embed_tokens = jax.random.normal(k_embed, (V, H), dtype=jnp.float32) * 0.02
    W = jax.random.normal(k_w, (H, G), dtype=jnp.float32)      # nn.Linear weight (out, in)
    W_t = W.T                                                   # (G, H) row-major for the kernel
    bias = jax.random.normal(k_b, (H,), dtype=jnp.float32) * 0.01

    # Forward-pass inputs.
    node_features_list = [
        jax.random.normal(k_nf1, (3, G), dtype=jnp.float32),
        jax.random.normal(k_nf2, (5, G), dtype=jnp.float32),
    ]
    N = 8
    edge_index = [(0, 1), (1, 2), (2, 3), (3, 4)]               # E = 4 (only len() is used)
    mapping = jnp.array([0, 1, 2, 3, 4, 5, 6, 7, 3, 2, 7, 5], dtype=jnp.int32)

    input_ids = jax.random.randint(k_ids, (B, S), 0, V, dtype=jnp.int32)
    is_node = jnp.array(
        [1, 1, 1, 0, 1, 1, 1, 1, 0, 1, 1, 1, 1, 0, 1, 0], dtype=bool
    ).reshape(B, S)                                              # exactly 12 True == len(mapping)

    # Host-side value checks mirroring the PyTorch asserts (outside any jit).
    assert int(mapping[-2]) == N - 1
    assert mapping.shape[0] == N + len(edge_index)

    out = projector_forward(embed_tokens, W_t, bias, input_ids, is_node,
                            node_features_list, edge_index, mapping)
    out = jax.block_until_ready(out)

    # Pure-JAX reference of the same semantics.
    nf = jnp.concatenate(node_features_list, axis=0)
    node_emb_ref = nf @ W_t + bias.reshape(1, -1)
    tok_ref = jnp.take(embed_tokens, input_ids.reshape(-1), axis=0)
    flat_mask = is_node.reshape(-1)
    rank = jnp.clip(jnp.cumsum(flat_mask.astype(jnp.int32)) - 1, 0, mapping.shape[0] - 1)
    src = jnp.where(flat_mask, mapping[rank], 0)
    ref = jnp.where(flat_mask[:, None], node_emb_ref[src], tok_ref).reshape(B, S, H)

    assert out.shape == (B, S, H)
    np.testing.assert_allclose(np.asarray(out), np.asarray(ref), rtol=1e-3, atol=1e-3)
    print("KERNEL_OK")
</pallas_src>

<mosaic_0001>
module attributes {stable_mosaic.version = 11 : i64} {
  func.func @_proj_kernel(%arg0: i32, %arg1: i32, %arg2: i32, %arg3: memref<8x128xf32, #tpu.memory_space<vmem>>, %arg4: memref<128x128xf32, #tpu.memory_space<vmem>>, %arg5: memref<1x128xf32, #tpu.memory_space<vmem>>, %arg6: memref<8x128xf32, #tpu.memory_space<vmem>>, %arg7: memref<8x128xf32, #tpu.memory_space<vmem>>) attributes {dimension_semantics = [#tpu.dimension_semantics<parallel>, #tpu.dimension_semantics<parallel>, #tpu.dimension_semantics<arbitrary>], iteration_bounds = array<i64: 1, 1, 1>, scalar_prefetch = 0 : i64, scratch_operands = 1 : i64, tpu.core_type = #tpu.core_type<tc>, window_params = [{transform_indices = @transform_0, window_bounds = array<i64: 8, 128>}, {transform_indices = @transform_1, window_bounds = array<i64: 128, 128>}, {transform_indices = @transform_2, window_bounds = array<i64: 1, 128>}, {transform_indices = @transform_3, window_bounds = array<i64: 8, 128>}]} {
    %c0_i32 = arith.constant 0 : i32
    %0 = arith.cmpi eq, %arg2, %c0_i32 : i32
    %1 = arith.extui %0 : i1 to i32
    %c0_i32_0 = arith.constant 0 : i32
    %2 = arith.cmpi ne, %1, %c0_i32_0 : i32
    scf.if %2 {
      %cst_10 = arith.constant 0.000000e+00 : f32
      %12 = vector.broadcast %cst_10 : f32 to vector<8x128xf32>
      %c0_11 = arith.constant 0 : index
      %c0_12 = arith.constant 0 : index
      %13 = vector.load %arg7[%c0_11, %c0_12] : memref<8x128xf32, #tpu.memory_space<vmem>>, vector<8x128xf32>
      tpu.vector_store %arg7[%c0_11, %c0_12], %12 {strides = array<i32>} : memref<8x128xf32, #tpu.memory_space<vmem>>, vector<8x128xf32>,
    } else {
    }
    %c0 = arith.constant 0 : index
    %c0_1 = arith.constant 0 : index
    %3 = vector.load %arg7[%c0, %c0_1] : memref<8x128xf32, #tpu.memory_space<vmem>>, vector<8x128xf32>
    %c0_2 = arith.constant 0 : index
    %c0_3 = arith.constant 0 : index
    %4 = vector.load %arg3[%c0_2, %c0_3] : memref<8x128xf32, #tpu.memory_space<vmem>>, vector<8x128xf32>
    %c0_4 = arith.constant 0 : index
    %c0_5 = arith.constant 0 : index
    %5 = vector.load %arg4[%c0_4, %c0_5] : memref<128x128xf32, #tpu.memory_space<vmem>>, vector<128x128xf32>
    %cst = arith.constant dense<0.000000e+00> : vector<8x128xf32>
    %6 = tpu.matmul %4, %5, %cst {dimension_numbers = #tpu.dot_dimension_numbers<[1], [0], [0], [1], [0, 0, 1, 1], [], []>} : vector<8x128xf32>, vector<128x128xf32>, vector<8x128xf32> -> vector<8x128xf32>
    %7 = arith.addf %3, %6 : vector<8x128xf32>
    %c0_6 = arith.constant 0 : index
    %c0_7 = arith.constant 0 : index
    %8 = vector.load %arg7[%c0_6, %c0_7] : memref<8x128xf32, #tpu.memory_space<vmem>>, vector<8x128xf32>
    tpu.vector_store %arg7[%c0_6, %c0_7], %7 {strides = array<i32>} : memref<8x128xf32, #tpu.memory_space<vmem>>, vector<8x128xf32>,
    %c0_i32_8 = arith.constant 0 : i32
    %9 = arith.cmpi eq, %arg2, %c0_i32_8 : i32
    %10 = arith.extui %9 : i1 to i32
    %c0_i32_9 = arith.constant 0 : i32
    %11 = arith.cmpi ne, %10, %c0_i32_9 : i32
    scf.if %11 {
      %c0_10 = arith.constant 0 : index
      %c0_11 = arith.constant 0 : index
      %12 = vector.load %arg7[%c0_10, %c0_11] : memref<8x128xf32, #tpu.memory_space<vmem>>, vector<8x128xf32>
      %c0_12 = arith.constant 0 : index
      %c0_13 = arith.constant 0 : index
      %13 = vector.load %arg5[%c0_12, %c0_13] : memref<1x128xf32, #tpu.memory_space<vmem>>, vector<1x128xf32>
      %14 = vector.broadcast %13 : vector<1x128xf32> to vector<8x128xf32>
      %15 = arith.addf %12, %14 : vector<8x128xf32>
      %c0_14 = arith.constant 0 : index
      %c0_15 = arith.constant 0 : index
      %16 = vector.load %arg6[%c0_14, %c0_15] : memref<8x128xf32, #tpu.memory_space<vmem>>, vector<8x128xf32>
      tpu.vector_store %arg6[%c0_14, %c0_15], %15 {strides = array<i32>} : memref<8x128xf32, #tpu.memory_space<vmem>>, vector<8x128xf32>,
    } else {
    }
    return
  }
  func.func @transform_0(%arg0: i32, %arg1: i32, %arg2: i32) -> (i32, i32) {
    %c0_i32 = arith.constant 0 : i32
    return %arg0, %arg2 : i32, i32
  }
  func.func @transform_1(%arg0: i32, %arg1: i32, %arg2: i32) -> (i32, i32) {
    %c0_i32 = arith.constant 0 : i32
    return %arg2, %arg1 : i32, i32
  }
  func.func @transform_2(%arg0: i32, %arg1: i32, %arg2: i32) -> (i32, i32) {
    %c0_i32 = arith.constant 0 : i32
    %c0_i32_0 = arith.constant 0 : i32
    return %c0_i32, %arg1 : i32, i32
  }
  func.func @transform_3(%arg0: i32, %arg1: i32, %arg2: i32) -> (i32, i32) {
    %c0_i32 = arith.constant 0 : i32
    return %arg0, %arg1 : i32, i32
  }
}

module attributes {stable_mosaic.version = 11 : i64} {
  func.func @_merge_kernel(%arg0: i32, %arg1: i32, %arg2: memref<16x1xi32, #tpu.memory_space<vmem>>, %arg3: memref<16x128xf32, #tpu.memory_space<vmem>>, %arg4: memref<8x128xf32, #tpu.memory_space<vmem>>, %arg5: memref<16x128xf32, #tpu.memory_space<vmem>>) attributes {dimension_semantics = [#tpu.dimension_semantics<parallel>, #tpu.dimension_semantics<parallel>], iteration_bounds = array<i64: 1, 1>, scalar_prefetch = 0 : i64, scratch_operands = 0 : i64, tpu.core_type = #tpu.core_type<tc>, window_params = [{transform_indices = @transform_0, window_bounds = array<i64: 16, 1>}, {transform_indices = @transform_1, window_bounds = array<i64: 16, 128>}, {transform_indices = @transform_2, window_bounds = array<i64: 8, 128>}, {transform_indices = @transform_3, window_bounds = array<i64: 16, 128>}]} {
    %c0 = arith.constant 0 : index
    %c0_0 = arith.constant 0 : index
    %0 = vector.load %arg2[%c0, %c0_0] : memref<16x1xi32, #tpu.memory_space<vmem>>, vector<16x1xi32>
    %c0_1 = arith.constant 0 : index
    %c0_2 = arith.constant 0 : index
    %1 = vector.load %arg4[%c0_1, %c0_2] : memref<8x128xf32, #tpu.memory_space<vmem>>, vector<8x128xf32>
    %2 = tpu.iota {dimensions = array<i32: 1>} : vector<16x8xi32>
    %3 = vector.broadcast %0 : vector<16x1xi32> to vector<16x8xi32>
    %4 = arith.cmpi eq, %2, %3 : vector<16x8xi32>
    %5 = arith.extui %4 : vector<16x8xi1> to vector<16x8xi32>
    %6 = arith.sitofp %5 : vector<16x8xi32> to vector<16x8xf32>
    %cst = arith.constant dense<0.000000e+00> : vector<16x128xf32>
    %7 = tpu.matmul %6, %1, %cst {dimension_numbers = #tpu.dot_dimension_numbers<[1], [0], [0], [1], [0, 0, 1, 1], [], []>} : vector<16x8xf32>, vector<8x128xf32>, vector<16x128xf32> -> vector<16x128xf32>
    %c8_i32 = arith.constant 8 : i32
    %8 = vector.broadcast %c8_i32 : i32 to vector<16x1xi32>
    %9 = arith.cmpi slt, %0, %8 : vector<16x1xi32>
    %c0_3 = arith.constant 0 : index
    %c0_4 = arith.constant 0 : index
    %10 = vector.load %arg3[%c0_3, %c0_4] : memref<16x128xf32, #tpu.memory_space<vmem>>, vector<16x128xf32>
    %11 = vector.shape_cast %9 : vector<16x1xi1> to vector<16x1xi1>
    %12 = vector.broadcast %11 : vector<16x1xi1> to vector<16x128xi1>
    %13 = arith.select %12, %7, %10 : vector<16x128xi1>, vector<16x128xf32>
    %c0_5 = arith.constant 0 : index
    %c0_6 = arith.constant 0 : index
    %14 = vector.load %arg5[%c0_5, %c0_6] : memref<16x128xf32, #tpu.memory_space<vmem>>, vector<16x128xf32>
    tpu.vector_store %arg5[%c0_5, %c0_6], %13 {strides = array<i32>} : memref<16x128xf32, #tpu.memory_space<vmem>>, vector<16x128xf32>,
    return
  }
  func.func @transform_0(%arg0: i32, %arg1: i32) -> (i32, i32) {
    %c0_i32 = arith.constant 0 : i32
    %c0_i32_0 = arith.constant 0 : i32
    return %arg1, %c0_i32 : i32, i32
  }
  func.func @transform_1(%arg0: i32, %arg1: i32) -> (i32, i32) {
    %c0_i32 = arith.constant 0 : i32
    return %arg1, %arg0 : i32, i32
  }
  func.func @transform_2(%arg0: i32, %arg1: i32) -> (i32, i32) {
    %c0_i32 = arith.constant 0 : i32
    %c0_i32_0 = arith.constant 0 : i32
    return %c0_i32, %arg0 : i32, i32
  }
  func.func @transform_3(%arg0: i32, %arg1: i32) -> (i32, i32) {
    %c0_i32 = arith.constant 0 : i32
    return %arg1, %arg0 : i32, i32
  }
}

</mosaic_0001>

<llo_original>
// kernel: _projector_forward_impl.2
$region0: #{_projector_forward_impl.2}
  #allocation0 [shape = 'u32[]', space=smem, size = 0x4, offset = 0x4, fixed_abs, tag = 'smem constant byte address 0x4 - core index']
  #allocation1 [shape = 'u32[144,128]{1,0:T(1,128)}', space=vmem, size = 0x12000, scoped, tag = 'internal scratch']
  #allocation2 [shape = 'f32[8,128]{1,0:T(8,128)}', space=vmem, size = 0x1000, scoped, tag = 'scratch operand']
  %s0 = inlined_call_operand.vmem [shape: f32[8,128], index: 0, kind: input, shape index: {}]
  %s1 = inlined_call_operand.vmem [shape: f32[128,128], index: 1, kind: input, shape index: {}]
  %s2 = inlined_call_operand.vmem [shape: f32[1,128], index: 2, kind: input, shape index: {}]
  %s3 = inlined_call_operand.vmem [shape: f32[8,128], index: 3, kind: output, shape index: {}]
  %s4 = sld [smem:[#allocation0]]
  $region30: #{_projector_forward_impl.2} parent=0
    _
  %s6 = ssub.s32 1, %s4
  %s7 = scalar_select 0, %s6, %s4
  // Predicated region
  $region2: #{_projector_forward_impl.2} parent=0 // pred_check
    _
  $region3: #{_projector_forward_impl.2} parent=0 // pred_check_branch
    %9 = sbr.rel (0) target = $region5
  $region4: #{_projector_forward_impl.2} parent=0 // pred_region
    _
  $region5: #{_projector_forward_impl.2} parent=0 // pred_fallthru
    _
  // Predicated region
  $region6: #{_projector_forward_impl.2} parent=0 // pred_check
    _
  $region7: #{_projector_forward_impl.2} parent=0 // pred_check_branch
    %11 = sbr.rel (0) target = $region9
  $region8: #{_projector_forward_impl.2} parent=0 // pred_region
    _
  $region9: #{_projector_forward_impl.2} parent=0 // pred_fallthru
    _
  // Predicated region
  $region10: #{_projector_forward_impl.2} parent=0 // pred_check
    _
  $region11: #{_projector_forward_impl.2} parent=0 // pred_check_branch
    %13 = sbr.rel (0) target = $region13
  $region12: #{_projector_forward_impl.2} parent=0 // pred_region
    _
  $region13: #{_projector_forward_impl.2} parent=0 // pred_fallthru
    _
  %p14 = scmp.eq.s32.totalorder 0, 0
  // Predicated region
  $region14: #{_projector_forward_impl.2} parent=0 // pred_check
    %p15 = pneg %p14
  $region15: #{_projector_forward_impl.2} parent=0 // pred_check_branch
    %17 = sbr.rel (%p15) target = $region17
  $region16: #{_projector_forward_impl.2} parent=0 // pred_region
    %18 = vst [vmem:[#allocation2] sm:$0xff] 0.0
  $region17: #{_projector_forward_impl.2} parent=0 // pred_fallthru
    _
  %v19 = vld [vmem:[#allocation2] sm:$0xff]
  %v20 = vld [vmem:[%s0] sm:$0xff]
  %v21 = vld [vmem:[%s1] sm:$0xff]
  %v22 = vld [vmem:[%s1 + $0x8] sm:$0xff]
  %v23 = vld [vmem:[%s1 + $0x10] sm:$0xff]
  %v24 = vld [vmem:[%s1 + $0x18] sm:$0xff]
  %v25 = vld [vmem:[%s1 + $0x20] sm:$0xff]
  %v26 = vld [vmem:[%s1 + $0x28] sm:$0xff]
  %v27 = vld [vmem:[%s1 + $0x30] sm:$0xff]
  %v28 = vld [vmem:[%s1 + $0x38] sm:$0xff]
  %v29 = vld [vmem:[%s1 + $0x40] sm:$0xff]
  %v30 = vld [vmem:[%s1 + $0x48] sm:$0xff]
  %v31 = vld [vmem:[%s1 + $0x50] sm:$0xff]
  %v32 = vld [vmem:[%s1 + $0x58] sm:$0xff]
  %v33 = vld [vmem:[%s1 + $0x60] sm:$0xff]
  %v34 = vld [vmem:[%s1 + $0x68] sm:$0xff]
  %v35 = vld [vmem:[%s1 + $0x70] sm:$0xff]
  %v36 = vld [vmem:[%s1 + $0x78] sm:$0xff]
  %37 = vmatprep.subr.mxu0 0.0
  %38 = vmatpush1.msra.mxu0 %v21
  %39 = vmatprep.subr.mxu0 0.0
  %40 = vmatpush1.msra.mxu0 %v22
  %41 = vmatprep.subr.mxu0 0.0
  %42 = vmatpush1.msra.mxu0 %v23
  %43 = vmatprep.subr.mxu0 0.0
  %44 = vmatpush1.msra.mxu0 %v24
  %45 = vmatprep.subr.mxu0 0.0
  %46 = vmatpush1.msra.mxu0 %v25
  %47 = vmatprep.subr.mxu0 0.0
  %48 = vmatpush1.msra.mxu0 %v26
  %49 = vmatprep.subr.mxu0 0.0
  %50 = vmatpush1.msra.mxu0 %v27
  %51 = vmatprep.subr.mxu0 0.0
  %52 = vmatpush1.msra.mxu0 %v28
  %53 = vmatprep.subr.mxu0 0.0
  %54 = vmatpush1.msra.mxu0 %v29
  %55 = vmatprep.subr.mxu0 0.0
  %56 = vmatpush1.msra.mxu0 %v30
  %57 = vmatprep.subr.mxu0 0.0
  %58 = vmatpush1.msra.mxu0 %v31
  %59 = vmatprep.subr.mxu0 0.0
  %60 = vmatpush1.msra.mxu0 %v32
  %61 = vmatprep.subr.mxu0 0.0
  %62 = vmatpush1.msra.mxu0 %v33
  %63 = vmatprep.subr.mxu0 0.0
  %64 = vmatpush1.msra.mxu0 %v34
  %65 = vmatprep.subr.mxu0 0.0
  %66 = vmatpush1.msra.mxu0 %v35
  %67 = vmatprep.subr.mxu0 0.0
  %68 = vmatpush1.msra.mxu0 %v36
  %69 = vmatprep.subr.mxu0 0.0
  %70 = vmatpush1.msra.mxu0 0.0
  %71 = vmatprep.subr.mxu0 0.0
  %72 = vmatpush1.msra.mxu0 0.0
  %73 = vmatprep.subr.mxu0 0.0
  %74 = vmatpush1.msra.mxu0 0.0
  %75 = vmatprep.subr.mxu0 0.0
  %76 = vmatpush1.msra.mxu0 0.0
  %77 = vmatprep.subr.mxu0 0.0
  %78 = vmatpush1.msra.mxu0 0.0
  %79 = vmatprep.subr.mxu0 0.0
  %80 = vmatpush1.msra.mxu0 0.0
  %81 = vmatprep.subr.mxu0 0.0
  %82 = vmatpush1.msra.mxu0 0.0
  %83 = vmatprep.subr.mxu0 0.0
  %84 = vmatpush1.msra.mxu0 0.0
  %85 = vmatprep.subr.mxu0 0.0
  %86 = vmatpush1.msra.mxu0 0.0
  %87 = vmatprep.subr.mxu0 0.0
  %88 = vmatpush1.msra.mxu0 0.0
  %89 = vmatprep.subr.mxu0 0.0
  %90 = vmatpush1.msra.mxu0 0.0
  %91 = vmatprep.subr.mxu0 0.0
  %92 = vmatpush1.msra.mxu0 0.0
  %93 = vmatprep.subr.mxu0 0.0
  %94 = vmatpush1.msra.mxu0 0.0
  %95 = vmatprep.subr.mxu0 0.0
  %96 = vmatpush1.msra.mxu0 0.0
  %97 = vmatprep.subr.mxu0 0.0
  %98 = vmatpush1.msra.mxu0 0.0
  %99 = vmatprep.subr.mxu0 0.0
  %100 = vmatpush1.msra.mxu0 0.0
  %101 = vmatprep.mubr.f32.mxu0 0.0
  %102 = vmatmul.mubr.f32.gmra.mrb[0].mxu0 %v20
  %v103 = vpop.f32.mrb[0].mxu0
  %v104 = vadd.f32 0.0, %v103
  %v105 = vpop.f32.mrb[0].mxu0
  %106 = vdwg.mxu0
  %v107 = vadd.f32 %v19, %v104
  %108 = vst [vmem:[#allocation2] sm:$0xff] %v107
  // Predicated region
  $region18: #{_projector_forward_impl.2} parent=0 // pred_check
    %p109 = pneg %p14
  $region19: #{_projector_forward_impl.2} parent=0 // pred_check_branch
    %111 = sbr.rel (%p109) target = $region21
  $region20: #{_projector_forward_impl.2} parent=0 // pred_region
    %v112 = vld [vmem:[#allocation2] sm:$0xff]
    %v113 = vld [vmem:[%s2] sm:$0x1]
    %v115 = vlaneseq
    %v116 = vshrl.u32 %v115, 7
    %v117 = vsub.s32 0, %v116
    %v118 = vrot.slane %v113, %v117
    %v120 = vadd.f32 %v112, %v118
    %121 = vst [vmem:[%s3] sm:$0xff] %v120
  $region21: #{_projector_forward_impl.2} parent=0 // pred_fallthru
    _
  // Predicated region
  $region22: #{_projector_forward_impl.2} parent=0 // pred_check
    _
  $region23: #{_projector_forward_impl.2} parent=0 // pred_check_branch
    %123 = sbr.rel (0) target = $region25
  $region24: #{_projector_forward_impl.2} parent=0 // pred_region
    _
  $region25: #{_projector_forward_impl.2} parent=0 // pred_fallthru
    _
  // Predicated region
  $region26: #{_projector_forward_impl.2} parent=0 // pred_check
    _
  $region27: #{_projector_forward_impl.2} parent=0 // pred_check_branch
    %125 = sbr.rel (0) target = $region29
  $region28: #{_projector_forward_impl.2} parent=0 // pred_region
    _
  $region29: #{_projector_forward_impl.2} parent=0 // pred_fallthru
    _

// kernel: _projector_forward_impl.3
$region0: #{_projector_forward_impl.3}
  #allocation0 [shape = 'u32[]', space=smem, size = 0x4, offset = 0x4, fixed_abs, tag = 'smem constant byte address 0x4 - core index']
  #allocation1 [shape = 'u32[144,128]{1,0:T(1,128)}', space=vmem, size = 0x12000, scoped, tag = 'internal scratch']
  %s0 = inlined_call_operand.vmem [shape: s32[16,1], index: 0, kind: input, shape index: {}]
  %s1 = inlined_call_operand.vmem [shape: f32[16,128], index: 1, kind: input, shape index: {}, may-alias: {1,3}]
  %s2 = inlined_call_operand.vmem [shape: f32[8,128], index: 2, kind: input, shape index: {}]
  %s3 = inlined_call_operand.vmem [shape: f32[16,128], index: 3, kind: output, shape index: {}, may-alias: {1,3}]
  %s4 = sld [smem:[#allocation0]]
  $region22: #{_projector_forward_impl.3} parent=0
    _
  %s6 = ssub.s32 1, %s4
  %s7 = scalar_select 0, %s6, %s4
  // Predicated region
  $region2: #{_projector_forward_impl.3} parent=0 // pred_check
    _
  $region3: #{_projector_forward_impl.3} parent=0 // pred_check_branch
    %9 = sbr.rel (0) target = $region5
  $region4: #{_projector_forward_impl.3} parent=0 // pred_region
    _
  $region5: #{_projector_forward_impl.3} parent=0 // pred_fallthru
    _
  // Predicated region
  $region6: #{_projector_forward_impl.3} parent=0 // pred_check
    _
  $region7: #{_projector_forward_impl.3} parent=0 // pred_check_branch
    %11 = sbr.rel (0) target = $region9
  $region8: #{_projector_forward_impl.3} parent=0 // pred_region
    _
  $region9: #{_projector_forward_impl.3} parent=0 // pred_fallthru
    _
  // Predicated region
  $region10: #{_projector_forward_impl.3} parent=0 // pred_check
    _
  $region11: #{_projector_forward_impl.3} parent=0 // pred_check_branch
    %13 = sbr.rel (0) target = $region13
  $region12: #{_projector_forward_impl.3} parent=0 // pred_region
    _
  $region13: #{_projector_forward_impl.3} parent=0 // pred_fallthru
    _
  %v14 = vld [vmem:[%s0] sm:$0xff]
  %v15 = vld [vmem:[%s0 + $0x8] sm:$0xff]
  %v16 = vld [vmem:[%s2] sm:$0xff]
  %v17 = vlaneseq
  %v18 = vand.u32 %v17, 127
  %19 = vset.pattern.permute.xlu0 0
  %20 = vperm.xlu0 %19, %v14
  %v21 = vpop.permute.xlu0 %20
  %22 = vset.pattern.permute.xlu0 0
  %23 = vperm.xlu0 %22, %v15
  %v24 = vpop.permute.xlu0 %23
  %vm25 = vcmp.eq.s32.totalorder %v18, %v21
  %vm26 = vcmp.eq.s32.totalorder %v18, %v24
  %v27 = vsel %vm25, 1, 0
  %v28 = vsel %vm26, 1, 0
  %v29 = vcvt.s32.f32 %v27
  %v30 = vcvt.s32.f32 %v28
  %vm31 = vcmask 64512
  %v33 = vsel %vm31, %v29, 0
  %v36 = vsel %vm31, %v30, 0
  %38 = vmatprep.subr.mxu0 0.0
  %39 = vmatpush1.msra.mxu0 %v16
  %40 = vmatprep.subr.mxu0 0.0
  %41 = vmatpush1.msra.mxu0 0.0
  %42 = vmatprep.subr.mxu0 0.0
  %43 = vmatpush1.msra.mxu0 0.0
  %44 = vmatprep.subr.mxu0 0.0
  %45 = vmatpush1.msra.mxu0 0.0
  %46 = vmatprep.subr.mxu0 0.0
  %47 = vmatpush1.msra.mxu0 0.0
  %48 = vmatprep.subr.mxu0 0.0
  %49 = vmatpush1.msra.mxu0 0.0
  %50 = vmatprep.subr.mxu0 0.0
  %51 = vmatpush1.msra.mxu0 0.0
  %52 = vmatprep.subr.mxu0 0.0
  %53 = vmatpush1.msra.mxu0 0.0
  %54 = vmatprep.subr.mxu0 0.0
  %55 = vmatpush1.msra.mxu0 0.0
  %56 = vmatprep.subr.mxu0 0.0
  %57 = vmatpush1.msra.mxu0 0.0
  %58 = vmatprep.subr.mxu0 0.0
  %59 = vmatpush1.msra.mxu0 0.0
  %60 = vmatprep.subr.mxu0 0.0
  %61 = vmatpush1.msra.mxu0 0.0
  %62 = vmatprep.subr.mxu0 0.0
  %63 = vmatpush1.msra.mxu0 0.0
  %64 = vmatprep.subr.mxu0 0.0
  %65 = vmatpush1.msra.mxu0 0.0
  %66 = vmatprep.subr.mxu0 0.0
  %67 = vmatpush1.msra.mxu0 0.0
  %68 = vmatprep.subr.mxu0 0.0
  %69 = vmatpush1.msra.mxu0 0.0
  %70 = vmatprep.subr.mxu0 0.0
  %71 = vmatpush1.msra.mxu0 0.0
  %72 = vmatprep.subr.mxu0 0.0
  %73 = vmatpush1.msra.mxu0 0.0
  %74 = vmatprep.subr.mxu0 0.0
  %75 = vmatpush1.msra.mxu0 0.0
  %76 = vmatprep.subr.mxu0 0.0
  %77 = vmatpush1.msra.mxu0 0.0
  %78 = vmatprep.subr.mxu0 0.0
  %79 = vmatpush1.msra.mxu0 0.0
  %80 = vmatprep.subr.mxu0 0.0
  %81 = vmatpush1.msra.mxu0 0.0
  %82 = vmatprep.subr.mxu0 0.0
  %83 = vmatpush1.msra.mxu0 0.0
  %84 = vmatprep.subr.mxu0 0.0
  %85 = vmatpush1.msra.mxu0 0.0
  %86 = vmatprep.subr.mxu0 0.0
  %87 = vmatpush1.msra.mxu0 0.0
  %88 = vmatprep.subr.mxu0 0.0
  %89 = vmatpush1.msra.mxu0 0.0
  %90 = vmatprep.subr.mxu0 0.0
  %91 = vmatpush1.msra.mxu0 0.0
  %92 = vmatprep.subr.mxu0 0.0
  %93 = vmatpush1.msra.mxu0 0.0
  %94 = vmatprep.subr.mxu0 0.0
  %95 = vmatpush1.msra.mxu0 0.0
  %96 = vmatprep.subr.mxu0 0.0
  %97 = vmatpush1.msra.mxu0 0.0
  %98 = vmatprep.subr.mxu0 0.0
  %99 = vmatpush1.msra.mxu0 0.0
  %100 = vmatprep.subr.mxu0 0.0
  %101 = vmatpush1.msra.mxu0 0.0
  %102 = vmatprep.mubr.f32.mxu0 0.0
  %103 = vmatmul.mubr.f32.gmra.mrb[0].mxu0 %v33
  %v104 = vpop.f32.mrb[0].mxu0
  %v105 = vadd.f32 0.0, %v104
  %v106 = vpop.f32.mrb[0].mxu0
  %107 = vmatprep.mubr.f32.mxu0 0.0
  %108 = vmatmul.mubr.f32.gmra.mrb[0].mxu0 %v36
  %v109 = vpop.f32.mrb[0].mxu0
  %v110 = vadd.f32 0.0, %v109
  %v111 = vpop.f32.mrb[0].mxu0
  %112 = vdwg.mxu0
  %vm113 = vcmp.lt.s32.totalorder %v14, 8
  %vm114 = vcmp.lt.s32.totalorder %v15, 8
  %v115 = vld [vmem:[%s1] sm:$0xff]
  %v116 = vld [vmem:[%s1 + $0x8] sm:$0xff]
  %v117 = vsel %vm113, 1, 0
  %v118 = vsel %vm114, 1, 0
  %119 = vset.pattern.permute.xlu0 0
  %120 = vperm.xlu0 %119, %v117
  %v121 = vpop.permute.xlu0 %120
  %122 = vset.pattern.permute.xlu0 0
  %123 = vperm.xlu0 %122, %v118
  %v124 = vpop.permute.xlu0 %123
  %vm125 = vcmp.eq.s32.totalorder %v121, 1
  %vm126 = vcmp.eq.s32.totalorder %v124, 1
  %v127 = vsel %vm125, %v105, %v115
  %v128 = vsel %vm126, %v110, %v116
  %129 = vst [vmem:[%s3] sm:$0xff] %v127
  %130 = vst [vmem:[%s3 + $0x8] sm:$0xff] %v128
  // Predicated region
  $region14: #{_projector_forward_impl.3} parent=0 // pred_check
    _
  $region15: #{_projector_forward_impl.3} parent=0 // pred_check_branch
    %132 = sbr.rel (0) target = $region17
  $region16: #{_projector_forward_impl.3} parent=0 // pred_region
    _
  $region17: #{_projector_forward_impl.3} parent=0 // pred_fallthru
    _
  // Predicated region
  $region18: #{_projector_forward_impl.3} parent=0 // pred_check
    _
  $region19: #{_projector_forward_impl.3} parent=0 // pred_check_branch
    %134 = sbr.rel (0) target = $region21
  $region20: #{_projector_forward_impl.3} parent=0 // pred_region
    _
  $region21: #{_projector_forward_impl.3} parent=0 // pred_fallthru
    _

</llo_original>
